<compile_context>
chip_gen: v6e
topology: v6e:2x2x1
jax: 0.10.0
libtpu: 0.0.40
codegen_flags: <defaults>
</compile_context>

<pallas_src>
import functools

import jax
import jax.numpy as jnp
from jax.experimental import pallas as pl
from jax.experimental.pallas import tpu as pltpu

# Logical sizes from the PyTorch module.
F_IN = 309   # input / output features
H1 = 200
H2 = 100
CODE = 1

# Lane-padded sizes for the VMEM-resident fused weights.
H2_PAD = 128   # 100 -> 128  (fused encoder output)
H1_PAD = 256   # 200 -> 256  (fused decoder hidden)

USE_BF16 = True  # bf16 MXU operands, f32 accumulate; elementwise stays f32.


def _round_up(n, m):
    return ((n + m - 1) // m) * m


def _choose_tile(B, tile_b):
    """Batch tile: full batch for small B; otherwise a multiple of 8 that is
    capped so large batches produce >= 2 grid steps (lets v7x use both TCs)."""
    if B <= 16:
        return B                       # block == full batch dim (always legal)
    return min(tile_b, _round_up(pl.cdiv(B, 2), 8))


def ae_kernel(x_ref,
              w12_ref, b12_ref,    # fused Linear1+Linear2: (309,128), (1,128)
              w3t_ref,             # Linear(100,1) as (1,128) row (b3 folded into b45)
              w45_ref, b45_ref,    # fused Linear4+Linear5: (1,256), (1,256)
              w6_ref, b6_ref,      # Linear(200,309): (256,309), (1,309)
              o_ref):
    # ---------------- encoder ----------------
    # Fused Linear(309,200)+Linear(200,100), then ReLU. Cast to bf16 in-kernel
    # (no separate XLA pad/cast pass over HBM).
    x = x_ref[...].astype(w12_ref.dtype)                          # (TB, 309)
    h = jnp.dot(x, w12_ref[...], preferred_element_type=jnp.float32)  # (TB,128) f32
    h = jnp.maximum(h + b12_ref[...], 0.0)

    # Linear(100,1): VPU multiply + lane reduction (padded lanes are zero, so
    # the sum over 128 lanes is exact). b3 has been folded into b45.
    code = jnp.sum(h * w3t_ref[...], axis=-1, keepdims=True)      # (TB, 1)

    # ---------------- decoder ----------------
    # Fused Linear(1,100)+Linear(100,200) as a broadcast-FMA, then ReLU.
    h2 = jnp.maximum(code * w45_ref[...] + b45_ref[...], 0.0)     # (TB,256) f32

    # Linear(200,309) + Tanh.
    out = jnp.dot(h2.astype(w6_ref.dtype), w6_ref[...],
                  preferred_element_type=jnp.float32) + b6_ref[...]
    o_ref[...] = jnp.tanh(out).astype(o_ref.dtype)


def init_linear(key, fan_in, fan_out):
    """PyTorch-style default init: U(-1/sqrt(fan_in), 1/sqrt(fan_in)).
    Stored as (in, out) so the forward pass is x @ W + b."""
    kw, kb = jax.random.split(key)
    bound = 1.0 / (fan_in ** 0.5)
    w = jax.random.uniform(kw, (fan_in, fan_out), jnp.float32, -bound, bound)
    b = jax.random.uniform(kb, (1, fan_out), jnp.float32, -bound, bound)
    return w, b


def make_raw_params(key):
    keys = jax.random.split(key, 6)
    w1, b1 = init_linear(keys[0], F_IN, H1)
    w2, b2 = init_linear(keys[1], H1, H2)
    w3, b3 = init_linear(keys[2], H2, CODE)
    w4, b4 = init_linear(keys[3], CODE, H2)
    w5, b5 = init_linear(keys[4], H2, H1)
    w6, b6 = init_linear(keys[5], H1, F_IN)
    return (w1, b1, w2, b2, w3, b3, w4, b4, w5, b5, w6, b6)


def prepare_params(raw, use_bf16=USE_BF16):
    """Fuse adjacent linear layers, fold b3, lane-pad, cast MXU weights."""
    (w1, b1, w2, b2, w3, b3, w4, b4, w5, b5, w6, b6) = raw

    # Exact algebraic fusion (only fp rounding order changes), done in f32.
    w12 = w1 @ w2              # (309, 100)
    b12 = b1 @ w2 + b2         # (1, 100)
    w45 = w4 @ w5              # (1, 200)
    b45 = b4 @ w5 + b5         # (1, 200)
    b45 = b3 * w45 + b45       # fold encoder output bias into decoder bias
    w3t = w3.T                 # (1, 100)

    def pad_cols(a, cols):
        return jnp.pad(a, ((0, 0), (0, cols - a.shape[1])))

    def pad_rows(a, rows):
        return jnp.pad(a, ((0, rows - a.shape[0]), (0, 0)))

    mdt = jnp.bfloat16 if use_bf16 else jnp.float32
    w12p = pad_cols(w12, H2_PAD).astype(mdt)   # (309, 128) bf16
    b12p = pad_cols(b12, H2_PAD)               # (1, 128)   f32
    w3tp = pad_cols(w3t, H2_PAD)               # (1, 128)   f32
    w45p = pad_cols(w45, H1_PAD)               # (1, 256)   f32
    b45p = pad_cols(b45, H1_PAD)               # (1, 256)   f32
    w6p = pad_rows(w6, H1_PAD).astype(mdt)     # (256, 309) bf16
    b6p = b6                                   # (1, 309)   f32
    return (w12p, b12p, w3tp, w45p, b45p, w6p, b6p)


@functools.partial(jax.jit, static_argnames=("tile_b", "out_dtype"))
def autoencoder_forward(x, fused_params, tile_b=1024, out_dtype=jnp.float32):
    (w12, b12, w3t, w45, b45, w6, b6) = fused_params
    B = x.shape[0]
    tb = _choose_tile(B, tile_b)
    grid = (pl.cdiv(B, tb),)            # partial boundary block is masked by Pallas

    const = lambda i: (0, 0)            # weights/biases stay VMEM-resident across steps
    out = pl.pallas_call(
        ae_kernel,
        out_shape=jax.ShapeDtypeStruct((B, F_IN), out_dtype),
        grid=grid,
        in_specs=[
            pl.BlockSpec((tb, F_IN), lambda i: (i, 0)),    # x (streamed per batch tile)
            pl.BlockSpec((F_IN, H2_PAD), const),           # w12
            pl.BlockSpec((1, H2_PAD), const),              # b12
            pl.BlockSpec((1, H2_PAD), const),              # w3^T
            pl.BlockSpec((1, H1_PAD), const),              # w45
            pl.BlockSpec((1, H1_PAD), const),              # b45 (with b3 folded in)
            pl.BlockSpec((H1_PAD, F_IN), const),           # w6
            pl.BlockSpec((1, F_IN), const),                # b6
        ],
        out_specs=pl.BlockSpec((tb, F_IN), lambda i: (i, 0)),
        compiler_params=pltpu.CompilerParams(
            dimension_semantics=("parallel",),             # megacore-shard batch on v7x
        ),
    )(x, w12, b12, w3t, w45, b45, w6, b6)
    return out


def reference_forward(x, raw):
    """Pure-JAX f32 reference matching the unfused PyTorch module exactly."""
    (w1, b1, w2, b2, w3, b3, w4, b4, w5, b5, w6, b6) = raw
    h = x @ w1 + b1
    h = h @ w2 + b2
    h = jnp.maximum(h, 0.0)
    code = h @ w3 + b3
    h = code @ w4 + b4
    h = h @ w5 + b5
    h = jnp.maximum(h, 0.0)
    h = h @ w6 + b6
    return jnp.tanh(h)


if __name__ == "__main__":
    key = jax.random.PRNGKey(0)
    k_params, k_x1, k_x2 = jax.random.split(key, 3)

    raw = make_raw_params(k_params)
    fused = prepare_params(raw)

    # bf16 MXU operands + layer fusion change rounding order; f32 path is exact.
    tol = 2e-2 if USE_BF16 else 1e-5

    # Small batch: single grid step, block == full batch dim.
    x_small = jax.random.normal(k_x1, (8, F_IN), jnp.float32)
    out_small = jax.block_until_ready(autoencoder_forward(x_small, fused))
    ref_small = reference_forward(x_small, raw)
    assert out_small.shape == (8, F_IN)
    assert out_small.dtype == jnp.float32
    assert jnp.allclose(out_small, ref_small, atol=tol), "mismatch vs reference (B=8)"

    # Batch that forces 2 grid steps + a partial (masked) boundary block.
    x_big = jax.random.normal(k_x2, (260, F_IN), jnp.float32)
    out_big = jax.block_until_ready(autoencoder_forward(x_big, fused))
    ref_big = reference_forward(x_big, raw)
    assert out_big.shape == (260, F_IN)
    assert jnp.allclose(out_big, ref_big, atol=tol), "mismatch vs reference (B=260)"

    # Optional bf16 output path (halves output HBM traffic; looser tolerance).
    out_bf16 = jax.block_until_ready(
        autoencoder_forward(x_small, fused, out_dtype=jnp.bfloat16))
    assert out_bf16.dtype == jnp.bfloat16
    assert jnp.allclose(out_bf16.astype(jnp.float32), ref_small, atol=3e-2), \
        "mismatch vs reference (bf16 output)"

    print("KERNEL_OK")
</pallas_src>

<mosaic_0001>
module attributes {stable_mosaic.version = 11 : i64} {
  func.func @ae_kernel(%arg0: i32, %arg1: memref<8x309xf32, #tpu.memory_space<vmem>>, %arg2: memref<309x128xbf16, #tpu.memory_space<vmem>>, %arg3: memref<1x128xf32, #tpu.memory_space<vmem>>, %arg4: memref<1x128xf32, #tpu.memory_space<vmem>>, %arg5: memref<1x256xf32, #tpu.memory_space<vmem>>, %arg6: memref<1x256xf32, #tpu.memory_space<vmem>>, %arg7: memref<256x309xbf16, #tpu.memory_space<vmem>>, %arg8: memref<1x309xf32, #tpu.memory_space<vmem>>, %arg9: memref<8x309xf32, #tpu.memory_space<vmem>>) attributes {dimension_semantics = [#tpu.dimension_semantics<parallel>], iteration_bounds = array<i64: 1>, scalar_prefetch = 0 : i64, scratch_operands = 0 : i64, tpu.core_type = #tpu.core_type<tc>, window_params = [{transform_indices = @transform_0, window_bounds = array<i64: 8, 309>}, {pipeline_mode = #tpu.pipeline_mode<synchronous>, transform_indices = @transform_1, window_bounds = array<i64: 309, 128>}, {pipeline_mode = #tpu.pipeline_mode<synchronous>, transform_indices = @transform_2, window_bounds = array<i64: 1, 128>}, {pipeline_mode = #tpu.pipeline_mode<synchronous>, transform_indices = @transform_3, window_bounds = array<i64: 1, 128>}, {pipeline_mode = #tpu.pipeline_mode<synchronous>, transform_indices = @transform_4, window_bounds = array<i64: 1, 256>}, {pipeline_mode = #tpu.pipeline_mode<synchronous>, transform_indices = @transform_5, window_bounds = array<i64: 1, 256>}, {pipeline_mode = #tpu.pipeline_mode<synchronous>, transform_indices = @transform_6, window_bounds = array<i64: 256, 309>}, {pipeline_mode = #tpu.pipeline_mode<synchronous>, transform_indices = @transform_7, window_bounds = array<i64: 1, 309>}, {transform_indices = @transform_8, window_bounds = array<i64: 8, 309>}]} {
    %c0 = arith.constant 0 : index
    %c0_0 = arith.constant 0 : index
    %0 = vector.load %arg1[%c0, %c0_0] : memref<8x309xf32, #tpu.memory_space<vmem>>, vector<8x309xf32>
    %1 = arith.truncf %0 : vector<8x309xf32> to vector<8x309xbf16>
    %c0_1 = arith.constant 0 : index
    %c0_2 = arith.constant 0 : index
    %2 = vector.load %arg2[%c0_1, %c0_2] : memref<309x128xbf16, #tpu.memory_space<vmem>>, vector<309x128xbf16>
    %cst = arith.constant dense<0.000000e+00> : vector<8x128xf32>
    %3 = tpu.matmul %1, %2, %cst {dimension_numbers = #tpu.dot_dimension_numbers<[1], [0], [0], [1], [0, 0, 1, 1], [], []>} : vector<8x309xbf16>, vector<309x128xbf16>, vector<8x128xf32> -> vector<8x128xf32>
    %c0_3 = arith.constant 0 : index
    %c0_4 = arith.constant 0 : index
    %4 = vector.load %arg3[%c0_3, %c0_4] : memref<1x128xf32, #tpu.memory_space<vmem>>, vector<1x128xf32>
    %5 = vector.broadcast %4 : vector<1x128xf32> to vector<8x128xf32>
    %6 = arith.addf %3, %5 : vector<8x128xf32>
    %cst_5 = arith.constant 0.000000e+00 : f32
    %7 = vector.broadcast %cst_5 : f32 to vector<8x128xf32>
    %8 = arith.maximumf %6, %7 : vector<8x128xf32>
    %c0_6 = arith.constant 0 : index
    %c0_7 = arith.constant 0 : index
    %9 = vector.load %arg4[%c0_6, %c0_7] : memref<1x128xf32, #tpu.memory_space<vmem>>, vector<1x128xf32>
    %10 = vector.broadcast %9 : vector<1x128xf32> to vector<8x128xf32>
    %11 = arith.mulf %8, %10 : vector<8x128xf32>
    %cst_8 = arith.constant dense<0.000000e+00> : vector<8xf32>
    %12 = vector.multi_reduction <add>, %11, %cst_8 [1] : vector<8x128xf32> to vector<8xf32>
    %13 = vector.shape_cast %12 : vector<8xf32> to vector<8x1xf32>
    %c0_9 = arith.constant 0 : index
    %c0_10 = arith.constant 0 : index
    %14 = vector.load %arg5[%c0_9, %c0_10] : memref<1x256xf32, #tpu.memory_space<vmem>>, vector<1x256xf32>
    %15 = vector.broadcast %13 : vector<8x1xf32> to vector<8x256xf32>
    %16 = vector.broadcast %14 : vector<1x256xf32> to vector<8x256xf32>
    %17 = arith.mulf %15, %16 : vector<8x256xf32>
    %c0_11 = arith.constant 0 : index
    %c0_12 = arith.constant 0 : index
    %18 = vector.load %arg6[%c0_11, %c0_12] : memref<1x256xf32, #tpu.memory_space<vmem>>, vector<1x256xf32>
    %19 = vector.broadcast %18 : vector<1x256xf32> to vector<8x256xf32>
    %20 = arith.addf %17, %19 : vector<8x256xf32>
    %cst_13 = arith.constant 0.000000e+00 : f32
    %21 = vector.broadcast %cst_13 : f32 to vector<8x256xf32>
    %22 = arith.maximumf %20, %21 : vector<8x256xf32>
    %23 = arith.truncf %22 : vector<8x256xf32> to vector<8x256xbf16>
    %c0_14 = arith.constant 0 : index
    %c0_15 = arith.constant 0 : index
    %24 = vector.load %arg7[%c0_14, %c0_15] : memref<256x309xbf16, #tpu.memory_space<vmem>>, vector<256x309xbf16>
    %cst_16 = arith.constant dense<0.000000e+00> : vector<8x309xf32>
    %25 = tpu.matmul %23, %24, %cst_16 {dimension_numbers = #tpu.dot_dimension_numbers<[1], [0], [0], [1], [0, 0, 1, 1], [], []>} : vector<8x256xbf16>, vector<256x309xbf16>, vector<8x309xf32> -> vector<8x309xf32>
    %c0_17 = arith.constant 0 : index
    %c0_18 = arith.constant 0 : index
    %26 = vector.load %arg8[%c0_17, %c0_18] : memref<1x309xf32, #tpu.memory_space<vmem>>, vector<1x309xf32>
    %27 = vector.broadcast %26 : vector<1x309xf32> to vector<8x309xf32>
    %28 = arith.addf %25, %27 : vector<8x309xf32>
    %29 = math.tanh %28 : vector<8x309xf32>
    %c0_19 = arith.constant 0 : index
    %c0_20 = arith.constant 0 : index
    %30 = vector.load %arg9[%c0_19, %c0_20] : memref<8x309xf32, #tpu.memory_space<vmem>>, vector<8x309xf32>
    tpu.vector_store %arg9[%c0_19, %c0_20], %29 {strides = array<i32>} : memref<8x309xf32, #tpu.memory_space<vmem>>, vector<8x309xf32>,
    return
  }
  func.func @transform_0(%arg0: i32) -> (i32, i32) {
    %c0_i32 = arith.constant 0 : i32
    %c0_i32_0 = arith.constant 0 : i32
    return %arg0, %c0_i32 : i32, i32
  }
  func.func @transform_1(%arg0: i32) -> (i32, i32) {
    %c0_i32 = arith.constant 0 : i32
    %c0_i32_0 = arith.constant 0 : i32
    %c0_i32_1 = arith.constant 0 : i32
    return %c0_i32, %c0_i32_0 : i32, i32
  }
  func.func @transform_2(%arg0: i32) -> (i32, i32) {
    %c0_i32 = arith.constant 0 : i32
    %c0_i32_0 = arith.constant 0 : i32
    %c0_i32_1 = arith.constant 0 : i32
    return %c0_i32, %c0_i32_0 : i32, i32
  }
  func.func @transform_3(%arg0: i32) -> (i32, i32) {
    %c0_i32 = arith.constant 0 : i32
    %c0_i32_0 = arith.constant 0 : i32
    %c0_i32_1 = arith.constant 0 : i32
    return %c0_i32, %c0_i32_0 : i32, i32
  }
  func.func @transform_4(%arg0: i32) -> (i32, i32) {
    %c0_i32 = arith.constant 0 : i32
    %c0_i32_0 = arith.constant 0 : i32
    %c0_i32_1 = arith.constant 0 : i32
    return %c0_i32, %c0_i32_0 : i32, i32
  }
  func.func @transform_5(%arg0: i32) -> (i32, i32) {
    %c0_i32 = arith.constant 0 : i32
    %c0_i32_0 = arith.constant 0 : i32
    %c0_i32_1 = arith.constant 0 : i32
    return %c0_i32, %c0_i32_0 : i32, i32
  }
  func.func @transform_6(%arg0: i32) -> (i32, i32) {
    %c0_i32 = arith.constant 0 : i32
    %c0_i32_0 = arith.constant 0 : i32
    %c0_i32_1 = arith.constant 0 : i32
    return %c0_i32, %c0_i32_0 : i32, i32
  }
  func.func @transform_7(%arg0: i32) -> (i32, i32) {
    %c0_i32 = arith.constant 0 : i32
    %c0_i32_0 = arith.constant 0 : i32
    %c0_i32_1 = arith.constant 0 : i32
    return %c0_i32, %c0_i32_0 : i32, i32
  }
  func.func @transform_8(%arg0: i32) -> (i32, i32) {
    %c0_i32 = arith.constant 0 : i32
    %c0_i32_0 = arith.constant 0 : i32
    return %arg0, %c0_i32 : i32, i32
  }
}

</mosaic_0001>

<llo_original>
// kernel: autoencoder_forward.1
$region0: #{autoencoder_forward.1}
  #allocation0 [shape = 'u32[]', space=smem, size = 0x4, offset = 0x4, fixed_abs, tag = 'smem constant byte address 0x4 - core index']
  #allocation1 [shape = 'u32[144,128]{1,0:T(1,128)}', space=vmem, size = 0x12000, scoped, tag = 'internal scratch']
  %s0 = inlined_call_operand.vmem [shape: f32[8,309], index: 0, kind: input, shape index: {}]
  %s1 = inlined_call_operand.vmem [shape: bf16[309,128], index: 1, kind: input, shape index: {}]
  %s2 = inlined_call_operand.vmem [shape: f32[1,128], index: 2, kind: input, shape index: {}]
  %s3 = inlined_call_operand.vmem [shape: f32[1,128], index: 3, kind: input, shape index: {}]
  %s4 = inlined_call_operand.vmem [shape: f32[1,256], index: 4, kind: input, shape index: {}]
  %s5 = inlined_call_operand.vmem [shape: f32[1,256], index: 5, kind: input, shape index: {}]
  %s6 = inlined_call_operand.vmem [shape: bf16[256,309], index: 6, kind: input, shape index: {}]
  %s7 = inlined_call_operand.vmem [shape: f32[1,309], index: 7, kind: input, shape index: {}]
  %s8 = inlined_call_operand.hbm [shape: f32[8,309], index: 8, kind: output, shape index: {}]
  %s9 = sld [smem:[#allocation0]]
  $region42: #{autoencoder_forward.1} parent=0
    _
  %s11 = ssub.s32 1, %s9
  %s12 = scalar_select 0, %s11, %s9
  $region1: #{autoencoder_forward.1} parent=0
    #allocation2 [shape = 'u8[12288]{0}', space=vmem, size = 0x3000, scoped, tag = 'output window, operand 0, single buffered']
    #allocation3 [shape = 's32[1]{0}', space=sflag, size = 0x4, scoped, tag = 'scoped memory for autoencoder_forward.1']
    %13 = vsyncpa [#allocation3], 0
    // Predicated region
    $region2: #{autoencoder_forward.1} parent=1 // pred_check
      _
    $region3: #{autoencoder_forward.1} parent=1 // pred_check_branch
      %15 = sbr.rel (0) target = $region5
    $region4: #{autoencoder_forward.1} parent=1 // pred_region
      _
    $region5: #{autoencoder_forward.1} parent=1 // pred_fallthru
      _
    // Predicated region
    $region6: #{autoencoder_forward.1} parent=1 // pred_check
      _
    $region7: #{autoencoder_forward.1} parent=1 // pred_check_branch
      %17 = sbr.rel (0) target = $region9
    $region8: #{autoencoder_forward.1} parent=1 // pred_region
      _
    $region9: #{autoencoder_forward.1} parent=1 // pred_fallthru
      _
    // Predicated region
    $region10: #{autoencoder_forward.1} parent=1 // pred_check
      _
    $region11: #{autoencoder_forward.1} parent=1 // pred_check_branch
      %19 = sbr.rel (0) target = $region13
    $region12: #{autoencoder_forward.1} parent=1 // pred_region
      _
    $region13: #{autoencoder_forward.1} parent=1 // pred_fallthru
      _
    // Predicated region
    $region14: #{autoencoder_forward.1} parent=1 // pred_check
      _
    $region15: #{autoencoder_forward.1} parent=1 // pred_check_branch
      %21 = sbr.rel (0) target = $region17
    $region16: #{autoencoder_forward.1} parent=1 // pred_region
      _
    $region17: #{autoencoder_forward.1} parent=1 // pred_fallthru
      _
    // Predicated region
    $region18: #{autoencoder_forward.1} parent=1 // pred_check
      _
    $region19: #{autoencoder_forward.1} parent=1 // pred_check_branch
      %23 = sbr.rel (0) target = $region21
    $region20: #{autoencoder_forward.1} parent=1 // pred_region
      _
    $region21: #{autoencoder_forward.1} parent=1 // pred_fallthru
      _
    // Predicated region
    $region22: #{autoencoder_forward.1} parent=1 // pred_check
      _
    $region23: #{autoencoder_forward.1} parent=1 // pred_check_branch
      %25 = sbr.rel (0) target = $region25
    $region24: #{autoencoder_forward.1} parent=1 // pred_region
      _
    $region25: #{autoencoder_forward.1} parent=1 // pred_fallthru
      _
    // Predicated region
    $region26: #{autoencoder_forward.1} parent=1 // pred_check
      _
    $region27: #{autoencoder_forward.1} parent=1 // pred_check_branch
      %27 = sbr.rel (0) target = $region29
    $region28: #{autoencoder_forward.1} parent=1 // pred_region
      _
    $region29: #{autoencoder_forward.1} parent=1 // pred_fallthru
      _
    // Predicated region
    $region30: #{autoencoder_forward.1} parent=1 // pred_check
      _
    $region31: #{autoencoder_forward.1} parent=1 // pred_check_branch
      %29 = sbr.rel (0) target = $region33
    $region32: #{autoencoder_forward.1} parent=1 // pred_region
      _
    $region33: #{autoencoder_forward.1} parent=1 // pred_fallthru
      _
    %v31 = vld [vmem:[%s0] sm:$0xff]
    %v32 = vld [vmem:[%s0 + $0x8] sm:$0xff]
    %v33 = vld [vmem:[%s0 + $0x10] sm:$0xff]
    %v34 = vpack.c.bf16 %v31, %v31
    %v35 = vpack.c.bf16 %v32, %v32
    %v36 = vpack.c.bf16 %v33, %v33
    %v37 = vld [vmem:[%s1] sm:$0xf]
    %v38 = vld [vmem:[%s1 + $0x4] sm:$0xf]
    %v39 = vld [vmem:[%s1 + $0x8] sm:$0xf]
    %v40 = vld [vmem:[%s1 + $0xc] sm:$0xf]
    %v41 = vld [vmem:[%s1 + $0x10] sm:$0xf]
    %v42 = vld [vmem:[%s1 + $0x14] sm:$0xf]
    %v43 = vld [vmem:[%s1 + $0x18] sm:$0xf]
    %v44 = vld [vmem:[%s1 + $0x1c] sm:$0xf]
    %v45 = vld [vmem:[%s1 + $0x20] sm:$0xf]
    %v46 = vld [vmem:[%s1 + $0x24] sm:$0xf]
    %v47 = vld [vmem:[%s1 + $0x28] sm:$0xf]
    %v48 = vld [vmem:[%s1 + $0x2c] sm:$0xf]
    %v49 = vld [vmem:[%s1 + $0x30] sm:$0xf]
    %v50 = vld [vmem:[%s1 + $0x34] sm:$0xf]
    %v51 = vld [vmem:[%s1 + $0x38] sm:$0xf]
    %v52 = vld [vmem:[%s1 + $0x3c] sm:$0xf]
    %v53 = vld [vmem:[%s1 + $0x40] sm:$0xf]
    %v54 = vld [vmem:[%s1 + $0x44] sm:$0xf]
    %v55 = vld [vmem:[%s1 + $0x48] sm:$0xf]
    %v56 = vld [vmem:[%s1 + $0x4c] sm:$0xf]
    %v57 = vld [vmem:[%s1 + $0x50] sm:$0xf]
    %v58 = vld [vmem:[%s1 + $0x54] sm:$0xf]
    %v59 = vld [vmem:[%s1 + $0x58] sm:$0xf]
    %v60 = vld [vmem:[%s1 + $0x5c] sm:$0xf]
    %v61 = vld [vmem:[%s1 + $0x60] sm:$0xf]
    %v62 = vld [vmem:[%s1 + $0x64] sm:$0xf]
    %v63 = vld [vmem:[%s1 + $0x68] sm:$0xf]
    %v64 = vld [vmem:[%s1 + $0x6c] sm:$0xf]
    %v65 = vld [vmem:[%s1 + $0x70] sm:$0xf]
    %v66 = vld [vmem:[%s1 + $0x74] sm:$0xf]
    %v67 = vld [vmem:[%s1 + $0x78] sm:$0xf]
    %v68 = vld [vmem:[%s1 + $0x7c] sm:$0xf]
    %v69 = vld [vmem:[%s1 + $0x80] sm:$0xf]
    %v70 = vld [vmem:[%s1 + $0x84] sm:$0xf]
    %v71 = vld [vmem:[%s1 + $0x88] sm:$0xf]
    %v72 = vld [vmem:[%s1 + $0x8c] sm:$0xf]
    %v73 = vld [vmem:[%s1 + $0x90] sm:$0xf]
    %v74 = vld [vmem:[%s1 + $0x94] sm:$0xf]
    %v75 = vld [vmem:[%s1 + $0x98] sm:$0x7]
    %v76 = vld [vmem:[%s2] sm:$0x1]
    %v78 = vlaneseq
    %v79 = vshrl.u32 %v78, 7
    %v80 = vsub.s32 0, %v79
    %v81 = vrot.slane %v76, %v80
    %v122 = vunpack.c.l.b16 %v37
    %v123 = vunpack.c.l.b16 %v38
    %v124 = vunpack.c.l.b16 %v39
    %v125 = vunpack.c.l.b16 %v40
    %v126 = vunpack.c.l.b16 %v41
    %v127 = vunpack.c.l.b16 %v42
    %v128 = vunpack.c.l.b16 %v43
    %v129 = vunpack.c.l.b16 %v44
    %v130 = vunpack.c.l.b16 %v45
    %v131 = vunpack.c.l.b16 %v46
    %v132 = vunpack.c.l.b16 %v47
    %v133 = vunpack.c.l.b16 %v48
    %v134 = vunpack.c.l.b16 %v49
    %v135 = vunpack.c.l.b16 %v50
    %v136 = vunpack.c.l.b16 %v51
    %v137 = vunpack.c.l.b16 %v52
    %v138 = vunpack.c.l.b16 %v53
    %v139 = vunpack.c.l.b16 %v54
    %v140 = vunpack.c.l.b16 %v55
    %v141 = vunpack.c.l.b16 %v56
    %v142 = vunpack.c.l.b16 %v57
    %v143 = vunpack.c.l.b16 %v58
    %v144 = vunpack.c.l.b16 %v59
    %v145 = vunpack.c.l.b16 %v60
    %v146 = vunpack.c.l.b16 %v61
    %v147 = vunpack.c.l.b16 %v62
    %v148 = vunpack.c.l.b16 %v63
    %v149 = vunpack.c.l.b16 %v64
    %v150 = vunpack.c.l.b16 %v65
    %v151 = vunpack.c.l.b16 %v66
    %v152 = vunpack.c.l.b16 %v67
    %v153 = vunpack.c.l.b16 %v68
    %v154 = vunpack.c.l.b16 %v69
    %v155 = vunpack.c.l.b16 %v70
    %v156 = vunpack.c.l.b16 %v71
    %v157 = vunpack.c.l.b16 %v72
    %v158 = vunpack.c.l.b16 %v73
    %v159 = vunpack.c.l.b16 %v74
    %v160 = vunpack.c.l.b16 %v75
    %v161 = vpack.c.b16 %v123, %v122
    %v162 = vpack.c.b16 %v125, %v124
    %v163 = vpack.c.b16 %v127, %v126
    %v164 = vpack.c.b16 %v129, %v128
    %v165 = vpack.c.b16 %v131, %v130
    %v166 = vpack.c.b16 %v133, %v132
    %v167 = vpack.c.b16 %v135, %v134
    %v168 = vpack.c.b16 %v137, %v136
    %v169 = vpack.c.b16 %v139, %v138
    %v170 = vpack.c.b16 %v141, %v140
    %v171 = vpack.c.b16 %v143, %v142
    %v172 = vpack.c.b16 %v145, %v144
    %v173 = vpack.c.b16 %v147, %v146
    %v174 = vpack.c.b16 %v149, %v148
    %v175 = vpack.c.b16 %v151, %v150
    %v176 = vpack.c.b16 %v153, %v152
    %v177 = vpack.c.b16 %v155, %v154
    %v178 = vpack.c.b16 %v157, %v156
    %v179 = vpack.c.b16 %v159, %v158
    %v180 = vpack.c.b16 %v160, %v160
    %vm200 = vcmask 433152
    %v202 = vsel %vm200, %v36, 0
    %vm204 = vcmask 1041408
    %vm205 = vcmask 1042432
    %v206 = vsel %vm204, 4294967295, 65535
    %v207 = vsel %vm205, %v206, 0
    %v209 = vand.u32 %v180, %v207
    %211 = vmatprep.subr.bf16.mxu0 0
    %212 = vmatpush1.bf16.msra.mxu0 %v168
    %213 = vmatprep.subr.bf16.mxu0 0
    %214 = vmatpush1.bf16.msra.mxu0 %v167
    %215 = vmatprep.subr.bf16.mxu0 0
    %216 = vmatpush1.bf16.msra.mxu0 %v166
    %217 = vmatprep.subr.bf16.mxu0 0
    %218 = vmatpush1.bf16.msra.mxu0 %v165
    %219 = vmatprep.subr.bf16.mxu0 0
    %220 = vmatpush1.bf16.msra.mxu0 %v164
    %221 = vmatprep.subr.bf16.mxu0 0
    %222 = vmatpush1.bf16.msra.mxu0 %v163
    %223 = vmatprep.subr.bf16.mxu0 0
    %224 = vmatpush1.bf16.msra.mxu0 %v162
    %225 = vmatprep.subr.bf16.mxu0 0
    %226 = vmatpush1.bf16.msra.mxu0 %v161
    %227 = vmatprep.subr.bf16.mxu0 0
    %228 = vmatpush2.bf16.msra.mxu0 %v176
    %229 = vmatprep.subr.bf16.mxu0 0
    %230 = vmatpush2.bf16.msra.mxu0 %v175
    %231 = vmatprep.subr.bf16.mxu0 0
    %232 = vmatpush2.bf16.msra.mxu0 %v174
    %233 = vmatprep.subr.bf16.mxu0 0
    %234 = vmatpush2.bf16.msra.mxu0 %v173
    %235 = vmatprep.subr.bf16.mxu0 0
    %236 = vmatpush2.bf16.msra.mxu0 %v172
    %237 = vmatprep.subr.bf16.mxu0 0
    %238 = vmatpush2.bf16.msra.mxu0 %v171
    %239 = vmatprep.subr.bf16.mxu0 0
    %240 = vmatpush2.bf16.msra.mxu0 %v170
    %241 = vmatprep.subr.bf16.mxu0 0
    %242 = vmatpush2.bf16.msra.mxu0 %v169
    %243 = vmatprep.mubr.bf16.mxu0 %v35
    %244 = vmatmul.mubr.bf16.gmra.mxu0 %v34
    %v245 = vpop.f32.mrf.mxu0
    %v246 = vadd.f32 %v81, %v245
    %v247 = vpop.f32.mrf.mxu0
    %v248 = vpop.f32.mrf.mxu0
    %v249 = vpop.f32.mrf.mxu0
    %250 = vdwg.mxu0
    %251 = vmatprep.subr.bf16.mxu0 0
    %252 = vmatpush1.bf16.msra.mxu0 0
    %253 = vmatprep.subr.bf16.mxu0 0
    %254 = vmatpush1.bf16.msra.mxu0 0
    %255 = vmatprep.subr.bf16.mxu0 0
    %256 = vmatpush1.bf16.msra.mxu0 0
    %257 = vmatprep.subr.bf16.mxu0 0
    %258 = vmatpush1.bf16.msra.mxu0 0
    %259 = vmatprep.subr.bf16.mxu0 0
    %260 = vmatpush1.bf16.msra.mxu0 %v209
    %261 = vmatprep.subr.bf16.mxu0 0
    %262 = vmatpush1.bf16.msra.mxu0 %v179
    %263 = vmatprep.subr.bf16.mxu0 0
    %264 = vmatpush1.bf16.msra.mxu0 %v178
    %265 = vmatprep.subr.bf16.mxu0 0
    %266 = vmatpush1.bf16.msra.mxu0 %v177
    %267 = vmatprep.subr.bf16.mxu0 0
    %268 = vmatpush2.bf16.msra.mxu0 0
    %269 = vmatprep.subr.bf16.mxu0 0
    %270 = vmatpush2.bf16.msra.mxu0 0
    %271 = vmatprep.subr.bf16.mxu0 0
    %272 = vmatpush2.bf16.msra.mxu0 0
    %273 = vmatprep.subr.bf16.mxu0 0
    %274 = vmatpush2.bf16.msra.mxu0 0
    %275 = vmatprep.subr.bf16.mxu0 0
    %276 = vmatpush2.bf16.msra.mxu0 0
    %277 = vmatprep.subr.bf16.mxu0 0
    %278 = vmatpush2.bf16.msra.mxu0 0
    %279 = vmatprep.subr.bf16.mxu0 0
    %280 = vmatpush2.bf16.msra.mxu0 0
    %281 = vmatprep.subr.bf16.mxu0 0
    %282 = vmatpush2.bf16.msra.mxu0 0
    %283 = vmatprep.mubr.bf16.mxu0 0
    %284 = vmatmul.mubr.bf16.gmra.mxu0 %v202
    %v285 = vpop.f32.mrf.mxu0
    %v286 = vadd.f32 %v246, %v285
    %v287 = vpop.f32.mrf.mxu0
    %v288 = vpop.f32.mrf.mxu0
    %v289 = vpop.f32.mrf.mxu0
    %290 = vdwg.mxu0
    %v291 = vmax.f32 %v286, 0.0
    %v292 = vld [vmem:[%s3] sm:$0x1]
    %v294 = vlaneseq
    %v295 = vshrl.u32 %v294, 7
    %v296 = vsub.s32 0, %v295
    %v297 = vrot.slane %v292, %v296
    %v299 = vmul.f32 %v291, %v297
    %300 = vadd.xlane.f32.xlu0 %v299
    %v301 = vpop.xlane.xlu0 %300
    %v302 = vld [vmem:[%s4] sm:$0x3]
    %v304 = vlaneseq
    %v305 = vshrl.u32 %v304, 7
    %v306 = vsub.s32 0, %v305
    %v307 = vrot.slane %v302, %v306
    %v308 = vlaneseq
    %v309 = vshrl.u32 %v308, 7
    %v310 = vsub.s32 1, %v309
    %v311 = vrot.slane %v302, %v310
    %v314 = vmul.f32 %v301, %v307
    %v315 = vmul.f32 %v301, %v311
    %v316 = vld [vmem:[%s5] sm:$0x3]
    %v318 = vlaneseq
    %v319 = vshrl.u32 %v318, 7
    %v320 = vsub.s32 0, %v319
    %v321 = vrot.slane %v316, %v320
    %v322 = vlaneseq
    %v323 = vshrl.u32 %v322, 7
    %v324 = vsub.s32 1, %v323
    %v325 = vrot.slane %v316, %v324
    %v328 = vadd.f32 %v314, %v321
    %v329 = vadd.f32 %v315, %v325
    %v330 = vmax.f32 %v328, 0.0
    %v331 = vmax.f32 %v329, 0.0
    %v332 = vpack.c.bf16 %v330, %v330
    %v333 = vpack.c.bf16 %v331, %v331
    %v334 = vld [vmem:[%s6] sm:$0xff]
    %v335 = vld [vmem:[%s6 + $0x8] sm:$0xf]
    %v336 = vld [vmem:[%s6 + $0xc] sm:$0xff]
    %v337 = vld [vmem:[%s6 + $0x14] sm:$0xf]
    %v338 = vld [vmem:[%s6 + $0x18] sm:$0xff]
    %v339 = vld [vmem:[%s6 + $0x20] sm:$0xf]
    %v340 = vld [vmem:[%s6 + $0x24] sm:$0xff]
    %v341 = vld [vmem:[%s6 + $0x2c] sm:$0xf]
    %v342 = vld [vmem:[%s6 + $0x30] sm:$0xff]
    %v343 = vld [vmem:[%s6 + $0x38] sm:$0xf]
    %v344 = vld [vmem:[%s6 + $0x3c] sm:$0xff]
    %v345 = vld [vmem:[%s6 + $0x44] sm:$0xf]
    %v346 = vld [vmem:[%s6 + $0x48] sm:$0xff]
    %v347 = vld [vmem:[%s6 + $0x50] sm:$0xf]
    %v348 = vld [vmem:[%s6 + $0x54] sm:$0xff]
    %v349 = vld [vmem:[%s6 + $0x5c] sm:$0xf]
    %v350 = vld [vmem:[%s6 + $0x60] sm:$0xff]
    %v351 = vld [vmem:[%s6 + $0x68] sm:$0xf]
    %v352 = vld [vmem:[%s6 + $0x6c] sm:$0xff]
    %v353 = vld [vmem:[%s6 + $0x74] sm:$0xf]
    %v354 = vld [vmem:[%s6 + $0x78] sm:$0xff]
    %v355 = vld [vmem:[%s6 + $0x80] sm:$0xf]
    %v356 = vld [vmem:[%s6 + $0x84] sm:$0xff]
    %v357 = vld [vmem:[%s6 + $0x8c] sm:$0xf]
    %v358 = vld [vmem:[%s6 + $0x90] sm:$0xff]
    %v359 = vld [vmem:[%s6 + $0x98] sm:$0xf]
    %v360 = vld [vmem:[%s6 + $0x9c] sm:$0xff]
    %v361 = vld [vmem:[%s6 + $0xa4] sm:$0xf]
    %v362 = vld [vmem:[%s6 + $0xa8] sm:$0xff]
    %v363 = vld [vmem:[%s6 + $0xb0] sm:$0xf]
    %v364 = vld [vmem:[%s6 + $0xb4] sm:$0xff]
    %v365 = vld [vmem:[%s6 + $0xbc] sm:$0xf]
    %v366 = vld [vmem:[%s6 + $0xc0] sm:$0xff]
    %v367 = vld [vmem:[%s6 + $0xc8] sm:$0xf]
    %v368 = vld [vmem:[%s6 + $0xcc] sm:$0xff]
    %v369 = vld [vmem:[%s6 + $0xd4] sm:$0xf]
    %v370 = vld [vmem:[%s6 + $0xd8] sm:$0xff]
    %v371 = vld [vmem:[%s6 + $0xe0] sm:$0xf]
    %v372 = vld [vmem:[%s6 + $0xe4] sm:$0xff]
    %v373 = vld [vmem:[%s6 + $0xec] sm:$0xf]
    %v374 = vld [vmem:[%s6 + $0xf0] sm:$0xff]
    %v375 = vld [vmem:[%s6 + $0xf8] sm:$0xf]
    %v376 = vld [vmem:[%s6 + $0xfc] sm:$0xff]
    %v377 = vld [vmem:[%s6 + $0x104] sm:$0xf]
    %v378 = vld [vmem:[%s6 + $0x108] sm:$0xff]
    %v379 = vld [vmem:[%s6 + $0x110] sm:$0xf]
    %v380 = vld [vmem:[%s6 + $0x114] sm:$0xff]
    %v381 = vld [vmem:[%s6 + $0x11c] sm:$0xf]
    %v382 = vld [vmem:[%s6 + $0x120] sm:$0xff]
    %v383 = vld [vmem:[%s6 + $0x128] sm:$0xf]
    %v384 = vld [vmem:[%s6 + $0x12c] sm:$0xff]
    %v385 = vld [vmem:[%s6 + $0x134] sm:$0xf]
    %v386 = vld [vmem:[%s6 + $0x138] sm:$0xff]
    %v387 = vld [vmem:[%s6 + $0x140] sm:$0xf]
    %v388 = vld [vmem:[%s6 + $0x144] sm:$0xff]
    %v389 = vld [vmem:[%s6 + $0x14c] sm:$0xf]
    %v390 = vld [vmem:[%s6 + $0x150] sm:$0xff]
    %v391 = vld [vmem:[%s6 + $0x158] sm:$0xf]
    %v392 = vld [vmem:[%s6 + $0x15c] sm:$0xff]
    %v393 = vld [vmem:[%s6 + $0x164] sm:$0xf]
    %v394 = vld [vmem:[%s6 + $0x168] sm:$0xff]
    %v395 = vld [vmem:[%s6 + $0x170] sm:$0xf]
    %v396 = vld [vmem:[%s6 + $0x174] sm:$0xff]
    %v397 = vld [vmem:[%s6 + $0x17c] sm:$0xf]
    %v398 = vld [vmem:[%s7] sm:$0x7]
    %v400 = vlaneseq
    %v401 = vshrl.u32 %v400, 7
    %v402 = vsub.s32 0, %v401
    %v403 = vrot.slane %v398, %v402
    %v404 = vlaneseq
    %v405 = vshrl.u32 %v404, 7
    %v406 = vsub.s32 1, %v405
    %v407 = vrot.slane %v398, %v406
    %v408 = vlaneseq
    %v409 = vshrl.u32 %v408, 7
    %v410 = vsub.s32 2, %v409
    %v411 = vrot.slane %v398, %v410
    %v479 = vunpack.c.l.b16 %v334
    %v480 = vunpack.c.h.b16 %v334
    %v481 = vunpack.c.l.b16 %v335
    %v482 = vunpack.c.l.b16 %v336
    %v483 = vunpack.c.h.b16 %v336
    %v484 = vunpack.c.l.b16 %v337
    %v485 = vunpack.c.l.b16 %v338
    %v486 = vunpack.c.h.b16 %v338
    %v487 = vunpack.c.l.b16 %v339
    %v488 = vunpack.c.l.b16 %v340
    %v489 = vunpack.c.h.b16 %v340
    %v490 = vunpack.c.l.b16 %v341
    %v491 = vunpack.c.l.b16 %v342
    %v492 = vunpack.c.h.b16 %v342
    %v493 = vunpack.c.l.b16 %v343
    %v494 = vunpack.c.l.b16 %v344
    %v495 = vunpack.c.h.b16 %v344
    %v496 = vunpack.c.l.b16 %v345
    %v497 = vunpack.c.l.b16 %v346
    %v498 = vunpack.c.h.b16 %v346
    %v499 = vunpack.c.l.b16 %v347
    %v500 = vunpack.c.l.b16 %v348
    %v501 = vunpack.c.h.b16 %v348
    %v502 = vunpack.c.l.b16 %v349
    %v503 = vunpack.c.l.b16 %v350
    %v504 = vunpack.c.h.b16 %v350
    %v505 = vunpack.c.l.b16 %v351
    %v506 = vunpack.c.l.b16 %v352
    %v507 = vunpack.c.h.b16 %v352
    %v508 = vunpack.c.l.b16 %v353
    %v509 = vunpack.c.l.b16 %v354
    %v510 = vunpack.c.h.b16 %v354
    %v511 = vunpack.c.l.b16 %v355
    %v512 = vunpack.c.l.b16 %v356
    %v513 = vunpack.c.h.b16 %v356
    %v514 = vunpack.c.l.b16 %v357
    %v515 = vunpack.c.l.b16 %v358
    %v516 = vunpack.c.h.b16 %v358
    %v517 = vunpack.c.l.b16 %v359
    %v518 = vunpack.c.l.b16 %v360
    %v519 = vunpack.c.h.b16 %v360
    %v520 = vunpack.c.l.b16 %v361
    %v521 = vunpack.c.l.b16 %v362
    %v522 = vunpack.c.h.b16 %v362
    %v523 = vunpack.c.l.b16 %v363
    %v524 = vunpack.c.l.b16 %v364
    %v525 = vunpack.c.h.b16 %v364
    %v526 = vunpack.c.l.b16 %v365
    %v527 = vunpack.c.l.b16 %v366
    %v528 = vunpack.c.h.b16 %v366
    %v529 = vunpack.c.l.b16 %v367
    %v530 = vunpack.c.l.b16 %v368
    %v531 = vunpack.c.h.b16 %v368
    %v532 = vunpack.c.l.b16 %v369
    %v533 = vunpack.c.l.b16 %v370
    %v534 = vunpack.c.h.b16 %v370
    %v535 = vunpack.c.l.b16 %v371
    %v536 = vunpack.c.l.b16 %v372
    %v537 = vunpack.c.h.b16 %v372
    %v538 = vunpack.c.l.b16 %v373
    %v539 = vunpack.c.l.b16 %v374
    %v540 = vunpack.c.h.b16 %v374
    %v541 = vunpack.c.l.b16 %v375
    %v542 = vunpack.c.l.b16 %v376
    %v543 = vunpack.c.h.b16 %v376
    %v544 = vunpack.c.l.b16 %v377
    %v545 = vunpack.c.l.b16 %v378
    %v546 = vunpack.c.h.b16 %v378
    %v547 = vunpack.c.l.b16 %v379
    %v548 = vunpack.c.l.b16 %v380
    %v549 = vunpack.c.h.b16 %v380
    %v550 = vunpack.c.l.b16 %v381
    %v551 = vunpack.c.l.b16 %v382
    %v552 = vunpack.c.h.b16 %v382
    %v553 = vunpack.c.l.b16 %v383
    %v554 = vunpack.c.l.b16 %v384
    %v555 = vunpack.c.h.b16 %v384
    %v556 = vunpack.c.l.b16 %v385
    %v557 = vunpack.c.l.b16 %v386
    %v558 = vunpack.c.h.b16 %v386
    %v559 = vunpack.c.l.b16 %v387
    %v560 = vunpack.c.l.b16 %v388
    %v561 = vunpack.c.h.b16 %v388
    %v562 = vunpack.c.l.b16 %v389
    %v563 = vunpack.c.l.b16 %v390
    %v564 = vunpack.c.h.b16 %v390
    %v565 = vunpack.c.l.b16 %v391
    %v566 = vunpack.c.l.b16 %v392
    %v567 = vunpack.c.h.b16 %v392
    %v568 = vunpack.c.l.b16 %v393
    %v569 = vunpack.c.l.b16 %v394
    %v570 = vunpack.c.h.b16 %v394
    %v571 = vunpack.c.l.b16 %v395
    %v572 = vunpack.c.l.b16 %v396
    %v573 = vunpack.c.h.b16 %v396
    %v574 = vunpack.c.l.b16 %v397
    %v575 = vpack.c.b16 %v482, %v479
    %v576 = vpack.c.b16 %v483, %v480
    %v577 = vpack.c.b16 %v484, %v481
    %v578 = vpack.c.b16 %v488, %v485
    %v579 = vpack.c.b16 %v489, %v486
    %v580 = vpack.c.b16 %v490, %v487
    %v581 = vpack.c.b16 %v494, %v491
    %v582 = vpack.c.b16 %v495, %v492
    %v583 = vpack.c.b16 %v496, %v493
    %v584 = vpack.c.b16 %v500, %v497
    %v585 = vpack.c.b16 %v501, %v498
    %v586 = vpack.c.b16 %v502, %v499
    %v587 = vpack.c.b16 %v506, %v503
    %v588 = vpack.c.b16 %v507, %v504
    %v589 = vpack.c.b16 %v508, %v505
    %v590 = vpack.c.b16 %v512, %v509
    %v591 = vpack.c.b16 %v513, %v510
    %v592 = vpack.c.b16 %v514, %v511
    %v593 = vpack.c.b16 %v518, %v515
    %v594 = vpack.c.b16 %v519, %v516
    %v595 = vpack.c.b16 %v520, %v517
    %v596 = vpack.c.b16 %v524, %v521
    %v597 = vpack.c.b16 %v525, %v522
    %v598 = vpack.c.b16 %v526, %v523
    %v599 = vpack.c.b16 %v530, %v527
    %v600 = vpack.c.b16 %v531, %v528
    %v601 = vpack.c.b16 %v532, %v529
    %v602 = vpack.c.b16 %v536, %v533
    %v603 = vpack.c.b16 %v537, %v534
    %v604 = vpack.c.b16 %v538, %v535
    %v605 = vpack.c.b16 %v542, %v539
    %v606 = vpack.c.b16 %v543, %v540
    %v607 = vpack.c.b16 %v544, %v541
    %v608 = vpack.c.b16 %v548, %v545
    %v609 = vpack.c.b16 %v549, %v546
    %v610 = vpack.c.b16 %v550, %v547
    %v611 = vpack.c.b16 %v554, %v551
    %v612 = vpack.c.b16 %v555, %v552
    %v613 = vpack.c.b16 %v556, %v553
    %v614 = vpack.c.b16 %v560, %v557
    %v615 = vpack.c.b16 %v561, %v558
    %v616 = vpack.c.b16 %v562, %v559
    %v617 = vpack.c.b16 %v566, %v563
    %v618 = vpack.c.b16 %v567, %v564
    %v619 = vpack.c.b16 %v568, %v565
    %v620 = vpack.c.b16 %v572, %v569
    %v621 = vpack.c.b16 %v573, %v570
    %v622 = vpack.c.b16 %v574, %v571
    %671 = vmatprep.subr.bf16.mxu0 %v597
    %672 = vmatpush1.bf16.msra.mxu0 %v596
    %673 = vmatprep.subr.bf16.mxu0 %v594
    %674 = vmatpush1.bf16.msra.mxu0 %v593
    %675 = vmatprep.subr.bf16.mxu0 %v591
    %676 = vmatpush1.bf16.msra.mxu0 %v590
    %677 = vmatprep.subr.bf16.mxu0 %v588
    %678 = vmatpush1.bf16.msra.mxu0 %v587
    %679 = vmatprep.subr.bf16.mxu0 %v585
    %680 = vmatpush1.bf16.msra.mxu0 %v584
    %681 = vmatprep.subr.bf16.mxu0 %v582
    %682 = vmatpush1.bf16.msra.mxu0 %v581
    %683 = vmatprep.subr.bf16.mxu0 %v579
    %684 = vmatpush1.bf16.msra.mxu0 %v578
    %685 = vmatprep.subr.bf16.mxu0 %v576
    %686 = vmatpush1.bf16.msra.mxu0 %v575
    %687 = vmatprep.subr.bf16.mxu0 %v621
    %688 = vmatpush2.bf16.msra.mxu0 %v620
    %689 = vmatprep.subr.bf16.mxu0 %v618
    %690 = vmatpush2.bf16.msra.mxu0 %v617
    %691 = vmatprep.subr.bf16.mxu0 %v615
    %692 = vmatpush2.bf16.msra.mxu0 %v614
    %693 = vmatprep.subr.bf16.mxu0 %v612
    %694 = vmatpush2.bf16.msra.mxu0 %v611
    %695 = vmatprep.subr.bf16.mxu0 %v609
    %696 = vmatpush2.bf16.msra.mxu0 %v608
    %697 = vmatprep.subr.bf16.mxu0 %v606
    %698 = vmatpush2.bf16.msra.mxu0 %v605
    %699 = vmatprep.subr.bf16.mxu0 %v603
    %700 = vmatpush2.bf16.msra.mxu0 %v602
    %701 = vmatprep.subr.bf16.mxu0 %v600
    %702 = vmatpush2.bf16.msra.mxu0 %v599
    %703 = vmatprep.mubr.bf16.mxu0 %v333
    %704 = vmatmul.mubr.bf16.gmra.mxu0 %v332
    %v705 = vpop.f32.mrf.mxu0
    %v706 = vadd.f32 %v403, %v705
    %v707 = vpop.f32.mrf.mxu0
    %v708 = vadd.f32 %v407, %v707
    %v709 = vpop.f32.mrf.mxu0
    %v710 = vpop.f32.mrf.mxu0
    %711 = vdwg.mxu0
    %712 = vmatprep.subr.bf16.mxu0 0
    %713 = vmatpush1.bf16.msra.mxu0 %v598
    %714 = vmatprep.subr.bf16.mxu0 0
    %715 = vmatpush1.bf16.msra.mxu0 %v595
    %716 = vmatprep.subr.bf16.mxu0 0
    %717 = vmatpush1.bf16.msra.mxu0 %v592
    %718 = vmatprep.subr.bf16.mxu0 0
    %719 = vmatpush1.bf16.msra.mxu0 %v589
    %720 = vmatprep.subr.bf16.mxu0 0
    %721 = vmatpush1.bf16.msra.mxu0 %v586
    %722 = vmatprep.subr.bf16.mxu0 0
    %723 = vmatpush1.bf16.msra.mxu0 %v583
    %724 = vmatprep.subr.bf16.mxu0 0
    %725 = vmatpush1.bf16.msra.mxu0 %v580
    %726 = vmatprep.subr.bf16.mxu0 0
    %727 = vmatpush1.bf16.msra.mxu0 %v577
    %728 = vmatprep.subr.bf16.mxu0 0
    %729 = vmatpush2.bf16.msra.mxu0 %v622
    %730 = vmatprep.subr.bf16.mxu0 0
    %731 = vmatpush2.bf16.msra.mxu0 %v619
    %732 = vmatprep.subr.bf16.mxu0 0
    %733 = vmatpush2.bf16.msra.mxu0 %v616
    %734 = vmatprep.subr.bf16.mxu0 0
    %735 = vmatpush2.bf16.msra.mxu0 %v613
    %736 = vmatprep.subr.bf16.mxu0 0
    %737 = vmatpush2.bf16.msra.mxu0 %v610
    %738 = vmatprep.subr.bf16.mxu0 0
    %739 = vmatpush2.bf16.msra.mxu0 %v607
    %740 = vmatprep.subr.bf16.mxu0 0
    %741 = vmatpush2.bf16.msra.mxu0 %v604
    %742 = vmatprep.subr.bf16.mxu0 0
    %743 = vmatpush2.bf16.msra.mxu0 %v601
    %744 = vmatprep.mubr.bf16.mxu0 %v333
    %745 = vmatmul.mubr.bf16.gmra.mxu0 %v332
    %v746 = vpop.f32.mrf.mxu0
    %v747 = vadd.f32 %v411, %v746
    %v748 = vpop.f32.mrf.mxu0
    %v749 = vpop.f32.mrf.mxu0
    %v750 = vpop.f32.mrf.mxu0
    %751 = vdwg.mxu0
    %v752 = vtanh.pop %v706
    %v753 = vtanh.pop %v708
    %v754 = vtanh.pop %v747
    %755 = vst [vmem:[#allocation2] sm:$0xff] %v752
    %756 = vst [vmem:[#allocation2 + $0x8] sm:$0xff] %v753
    %757 = vst.msk [vmem:[#allocation2 + $0x10] sm:$0xff] %vm200, %v754
    // Predicated region
    $region34: #{autoencoder_forward.1} parent=1 // pred_check
      _
    $region35: #{autoencoder_forward.1} parent=1 // pred_check_branch
      %759 = sbr.rel (0) target = $region37
    $region36: #{autoencoder_forward.1} parent=1 // pred_region
      %s761 = ssub.s32 384, 384
      %762 = vsyncadd [#allocation3], %s761
      %s764 = sshll.u32 [#allocation2], 4
      %s765 = int_to_ptr.vmem [resolvable:$true] %s764
      %767 = dma.vmem_to_hbm [thread:$0]  %s765, 384, %s8, [#allocation3]
    $region37: #{autoencoder_forward.1} parent=1 // pred_fallthru
      _
    // Predicated region
    $region38: #{autoencoder_forward.1} parent=1 // pred_check
      _
    $region39: #{autoencoder_forward.1} parent=1 // pred_check_branch
      %769 = sbr.rel (0) target = $region41
    $region40: #{autoencoder_forward.1} parent=1 // pred_region
      %770 = dma.done [#allocation3], 384
    $region41: #{autoencoder_forward.1} parent=1 // pred_fallthru
      _
    %771 = vsyncpa [#allocation3], 1

</llo_original>
